<compile_context>
chip_gen: v5e
topology: v5e:2x2
jax: 0.10.0
libtpu: 0.0.40
codegen_flags: <defaults>
</compile_context>

<pallas_src>
import functools

import jax
import jax.numpy as jnp
from jax import lax
from jax.experimental import pallas as pl
from jax.experimental.pallas import tpu as pltpu


HEADS = 8
EMB = 16      # e
SEQ = 8       # t
BATCH = 2     # b


def _self_attention_kernel(xb_ref, wqkv_ref, bias_ref, wur_ref, msel_ref,
                           g_ref, h_ref, bu_ref, o_ref, *, e):
    # xb_ref:   (b*h*t, h*e)    block-diagonal replicated x
    # wqkv_ref: (h*e, 3*e)      [Wq | Wk | Wv], rows ordered (head, in-feature),
    #                           q/k columns pre-scaled by e**-0.25
    # bias_ref: (b*h*t, b*h*t)  block-diagonal additive mask bias (off-block -1e9)
    # wur_ref:  (e, h*e)        Wu rearranged: [ei, (j, m)] = Wu[(j, ei), m]
    # msel_ref: (b*h*t, h*e)    1.0 where column-head == row-head else 0.0
    # g_ref:    (h*e, e)        tiled identity: collapses column head blocks
    # h_ref:    (b*t, b*h*t)    0/1: collapses packed rows (bi, j, ti) -> (bi, ti)
    # bu_ref:   (1, e)          unifyheads bias
    # o_ref:    (b*t, e)        output

    # Single fused QKV projection; results land already packed per (b, head, t).
    qkv = jnp.dot(xb_ref[...], wqkv_ref[...], preferred_element_type=jnp.float32)
    q = qkv[:, 0:e]          # (b*h*t, e)
    k = qkv[:, e:2 * e]
    v = qkv[:, 2 * e:3 * e]

    # All (batch, head) score blocks in one MXU op, contracting the last dims
    # (no materialized k.T).
    s = lax.dot_general(q, k, (((1,), (1,)), ((), ())),
                        preferred_element_type=jnp.float32)      # (b*h*t, b*h*t)
    s = s + bias_ref[...]
    s = s - jnp.max(s, axis=-1, keepdims=True)
    p = jnp.exp(s)
    att = p * pl.reciprocal(jnp.sum(p, axis=-1, keepdims=True), approx=True)

    # att is exactly zero off the (batch, head) diagonal blocks (the -1e9 bias
    # underflows in exp), so one matmul yields every per-head output, packed.
    o_packed = jnp.dot(att, v, preferred_element_type=jnp.float32)   # (b*h*t, e)

    # unifyheads without any transpose: candidate per-head contributions,
    # select the matching head block, collapse columns (G) and rows (H).
    u = jnp.dot(o_packed, wur_ref[...], preferred_element_type=jnp.float32)
    zc = jnp.dot(u * msel_ref[...], g_ref[...],
                 preferred_element_type=jnp.float32)                 # (b*h*t, e)
    out = jnp.dot(h_ref[...], zc, preferred_element_type=jnp.float32)  # (b*t, e)
    o_ref[...] = (out + bu_ref[...]).astype(o_ref.dtype)


def self_attention(x, wk, wq, wv, wu, bu, mask, *, heads=HEADS, causal=False):
    b, t, e = x.shape
    h = heads
    assert wk.shape == (e, h * e)
    assert wq.shape == (e, h * e)
    assert wv.shape == (e, h * e)
    assert wu.shape == (h * e, e)
    assert mask.shape == (b, h, t, t)

    f32 = jnp.float32
    neg = f32(-1e9)

    # ---- host-side layout plumbing (no compute hoisted out of the kernel) ----
    # Fold q/k scaling into the weights and stack [Wq | Wk | Wv] with rows
    # ordered (head, in-feature) so a block-diagonal x operand yields packed q/k/v.
    scale = f32(float(e) ** (-0.25))

    def stack_heads(w):                       # (e, h*e) -> (h*e, e)
        return w.reshape(e, h, e).transpose(1, 0, 2).reshape(h * e, e)

    w_qkv = jnp.concatenate(
        [stack_heads(wq.astype(f32) * scale),
         stack_heads(wk.astype(f32) * scale),
         stack_heads(wv.astype(f32))], axis=1)                      # (h*e, 3e)

    # Wu rearranged so it applies to the packed (b*h*t, e) attention output.
    wu_r = wu.astype(f32).reshape(h, e, e).transpose(1, 0, 2).reshape(e, h * e)

    # (b, h, t, t) additive bias; mask==0 (-1e9) takes priority over the causal
    # fill, matching the PyTorch masked_fill order.  A large finite negative is
    # used for the causal term too: identical post-softmax (exp underflows to 0)
    # and avoids inf/NaN hazards.
    if causal:
        row = jnp.arange(t)[:, None]
        col = jnp.arange(t)[None, :]
        causal_bias = jnp.where(col > row, neg, f32(0.0))
    else:
        causal_bias = jnp.zeros((t, t), f32)
    bias4 = jnp.where(mask == 0, neg, causal_bias)                  # (b, h, t, t)

    # Lane-dense block-diagonal bias: off-diagonal blocks kill cross-head /
    # cross-batch score terms.
    bh = b * h
    blk_eye = jnp.eye(bh, dtype=bool)
    bias_full = jnp.where(blk_eye[:, None, :, None],
                          bias4.reshape(bh, t, t)[:, :, None, :],
                          neg).reshape(bh * t, bh * t)

    # Block-diagonal replicated x: row (bi, j, ti), col (j2, c) = x[bi,ti,c]*[j==j2].
    head_eye = jnp.eye(h, dtype=bool)
    x_blk = jnp.where(head_eye[None, :, None, :, None],
                      x.astype(f32)[:, None, :, None, :],
                      f32(0.0)).reshape(b * h * t, h * e)

    # Head-selection / collapse matrices for the unify stage.
    row_head = jnp.tile(jnp.repeat(jnp.arange(h), t), b)            # (b*h*t,)
    col_head = jnp.repeat(jnp.arange(h), e)                         # (h*e,)
    msel = (row_head[:, None] == col_head[None, :]).astype(f32)     # (b*h*t, h*e)
    g = jnp.tile(jnp.eye(e, dtype=f32), (h, 1))                     # (h*e, e)
    r_b = jnp.repeat(jnp.arange(b), t)
    r_t = jnp.tile(jnp.arange(t), b)
    c_b = jnp.repeat(jnp.arange(b), h * t)
    c_t = jnp.tile(jnp.arange(t), b * h)
    hmat = ((r_b[:, None] == c_b[None, :]) &
            (r_t[:, None] == c_t[None, :])).astype(f32)             # (b*t, b*h*t)

    bu2 = bu.astype(f32).reshape(1, e)

    bht = b * h * t
    kernel = functools.partial(_self_attention_kernel, e=e)

    out = pl.pallas_call(
        kernel,
        out_shape=jax.ShapeDtypeStruct((b * t, e), x.dtype),
        grid=(1,),   # whole batch in a single grid step (few hundred KiB)
        in_specs=[
            pl.BlockSpec((bht, h * e), lambda i: (0, 0)),      # x_blk
            pl.BlockSpec((h * e, 3 * e), lambda i: (0, 0)),    # stacked Wq|Wk|Wv
            pl.BlockSpec((bht, bht), lambda i: (0, 0)),        # block-diag bias
            pl.BlockSpec((e, h * e), lambda i: (0, 0)),        # Wu rearranged
            pl.BlockSpec((bht, h * e), lambda i: (0, 0)),      # head-select 0/1
            pl.BlockSpec((h * e, e), lambda i: (0, 0)),        # column collapse
            pl.BlockSpec((b * t, bht), lambda i: (0, 0)),      # row collapse
            pl.BlockSpec((1, e), lambda i: (0, 0)),            # bu
        ],
        out_specs=pl.BlockSpec((b * t, e), lambda i: (0, 0)),
        compiler_params=pltpu.CompilerParams(
            dimension_semantics=("arbitrary",)),
    )(x_blk, w_qkv, bias_full, wu_r, msel, g, hmat, bu2)

    return out.reshape(b, t, e)


def self_attention_ref(x, wk, wq, wv, wu, bu, mask, *, heads=HEADS, causal=False):
    """Pure-JAX reference matching the PyTorch forward."""
    b, t, e = x.shape
    K = (x @ wk).reshape(b, t, heads, e).transpose(0, 2, 1, 3)   # (b,h,t,e)
    Q = (x @ wq).reshape(b, t, heads, e).transpose(0, 2, 1, 3)
    V = (x @ wv).reshape(b, t, heads, e).transpose(0, 2, 1, 3)
    scale = float(e) ** (-0.25)
    dot = jnp.einsum('bhqe,bhke->bhqk', Q * scale, K * scale)
    if causal:
        row = jnp.arange(t)[:, None]
        col = jnp.arange(t)[None, :]
        dot = jnp.where(col > row, -jnp.inf, dot)
    dot = jnp.where(mask == 0, -1e9, dot)
    att = jax.nn.softmax(dot, axis=-1)
    out = jnp.einsum('bhqk,bhke->bhqe', att, V)
    out = out.transpose(0, 2, 1, 3).reshape(b, t, heads * e)
    return out @ wu + bu


if __name__ == "__main__":
    key = jax.random.PRNGKey(0)
    kx, kk, kq, kv, ku, kb, km = jax.random.split(key, 7)

    b, t, e, h = BATCH, SEQ, EMB, HEADS

    x = jax.random.normal(kx, (b, t, e), dtype=jnp.float32)
    # Deterministic synthetic parameters (shapes per nn.Linear defs, stored transposed).
    wk = jax.random.normal(kk, (e, h * e), dtype=jnp.float32) * 0.1
    wq = jax.random.normal(kq, (e, h * e), dtype=jnp.float32) * 0.1
    wv = jax.random.normal(kv, (e, h * e), dtype=jnp.float32) * 0.1
    wu = jax.random.normal(ku, (h * e, e), dtype=jnp.float32) * 0.1
    bu = jax.random.normal(kb, (e,), dtype=jnp.float32) * 0.1
    # Attention mask (0 = masked with -1e9), layout (b, h, t, t).  Keep the
    # diagonal unmasked so no softmax row is fully masked.
    mask = jax.random.bernoulli(km, p=0.8, shape=(b, h, t, t)).astype(jnp.int32)
    mask = jnp.maximum(mask, jnp.eye(t, dtype=jnp.int32)[None, None])

    ok = True
    for causal in (False, True):
        out = self_attention(x, wk, wq, wv, wu, bu, mask, heads=h, causal=causal)
        out = jax.block_until_ready(out)
        ref = self_attention_ref(x, wk, wq, wv, wu, bu, mask, heads=h, causal=causal)
        assert out.shape == (b, t, e)
        # Tolerance slightly loosened to accommodate the EUP approx reciprocal.
        ok = ok and bool(jnp.allclose(out, ref, rtol=5e-3, atol=5e-3))

    assert ok, "mismatch vs reference"
    print("KERNEL_OK")
</pallas_src>

<mosaic_0001>
module attributes {stable_mosaic.version = 11 : i64} {
  func.func @_self_attention_kernel(%arg0: i32, %arg1: memref<128x128xf32, #tpu.memory_space<vmem>>, %arg2: memref<128x48xf32, #tpu.memory_space<vmem>>, %arg3: memref<128x128xf32, #tpu.memory_space<vmem>>, %arg4: memref<16x128xf32, #tpu.memory_space<vmem>>, %arg5: memref<128x128xf32, #tpu.memory_space<vmem>>, %arg6: memref<128x16xf32, #tpu.memory_space<vmem>>, %arg7: memref<16x128xf32, #tpu.memory_space<vmem>>, %arg8: memref<1x16xf32, #tpu.memory_space<vmem>>, %arg9: memref<16x16xf32, #tpu.memory_space<vmem>>) attributes {dimension_semantics = [#tpu.dimension_semantics<arbitrary>], iteration_bounds = array<i64: 1>, scalar_prefetch = 0 : i64, scratch_operands = 0 : i64, tpu.core_type = #tpu.core_type<tc>, window_params = [{pipeline_mode = #tpu.pipeline_mode<synchronous>, transform_indices = @transform_0, window_bounds = array<i64: 128, 128>}, {pipeline_mode = #tpu.pipeline_mode<synchronous>, transform_indices = @transform_1, window_bounds = array<i64: 128, 48>}, {pipeline_mode = #tpu.pipeline_mode<synchronous>, transform_indices = @transform_2, window_bounds = array<i64: 128, 128>}, {pipeline_mode = #tpu.pipeline_mode<synchronous>, transform_indices = @transform_3, window_bounds = array<i64: 16, 128>}, {pipeline_mode = #tpu.pipeline_mode<synchronous>, transform_indices = @transform_4, window_bounds = array<i64: 128, 128>}, {pipeline_mode = #tpu.pipeline_mode<synchronous>, transform_indices = @transform_5, window_bounds = array<i64: 128, 16>}, {pipeline_mode = #tpu.pipeline_mode<synchronous>, transform_indices = @transform_6, window_bounds = array<i64: 16, 128>}, {pipeline_mode = #tpu.pipeline_mode<synchronous>, transform_indices = @transform_7, window_bounds = array<i64: 1, 16>}, {pipeline_mode = #tpu.pipeline_mode<synchronous>, transform_indices = @transform_8, window_bounds = array<i64: 16, 16>}]} {
    %c0 = arith.constant 0 : index
    %c0_0 = arith.constant 0 : index
    %0 = vector.load %arg1[%c0, %c0_0] : memref<128x128xf32, #tpu.memory_space<vmem>>, vector<128x128xf32>
    %c0_1 = arith.constant 0 : index
    %c0_2 = arith.constant 0 : index
    %1 = vector.load %arg2[%c0_1, %c0_2] : memref<128x48xf32, #tpu.memory_space<vmem>>, vector<128x48xf32>
    %cst = arith.constant dense<0.000000e+00> : vector<128x48xf32>
    %2 = tpu.matmul %0, %1, %cst {dimension_numbers = #tpu.dot_dimension_numbers<[1], [0], [0], [1], [0, 0, 1, 1], [], []>} : vector<128x128xf32>, vector<128x48xf32>, vector<128x48xf32> -> vector<128x48xf32>
    %3 = vector.extract_strided_slice %2 {offsets = [0, 0], sizes = [128, 16], strides = [1, 1]} : vector<128x48xf32> to vector<128x16xf32>
    %4 = vector.extract_strided_slice %2 {offsets = [0, 16], sizes = [128, 16], strides = [1, 1]} : vector<128x48xf32> to vector<128x16xf32>
    %5 = vector.extract_strided_slice %2 {offsets = [0, 32], sizes = [128, 16], strides = [1, 1]} : vector<128x48xf32> to vector<128x16xf32>
    %cst_3 = arith.constant dense<0.000000e+00> : vector<128x128xf32>
    %6 = tpu.matmul %3, %4, %cst_3 {dimension_numbers = #tpu.dot_dimension_numbers<[1], [1], [0], [0], [0, 0, 1, 0], [], []>} : vector<128x16xf32>, vector<128x16xf32>, vector<128x128xf32> -> vector<128x128xf32>
    %c0_4 = arith.constant 0 : index
    %c0_5 = arith.constant 0 : index
    %7 = vector.load %arg3[%c0_4, %c0_5] : memref<128x128xf32, #tpu.memory_space<vmem>>, vector<128x128xf32>
    %8 = arith.addf %6, %7 : vector<128x128xf32>
    %cst_6 = arith.constant dense<0xFF800000> : vector<128xf32>
    %9 = vector.multi_reduction <maximumf>, %8, %cst_6 [1] : vector<128x128xf32> to vector<128xf32>
    %10 = vector.shape_cast %9 : vector<128xf32> to vector<128x1xf32>
    %11 = vector.broadcast %10 : vector<128x1xf32> to vector<128x128xf32>
    %12 = arith.subf %8, %11 : vector<128x128xf32>
    %13 = math.exp %12 : vector<128x128xf32>
    %cst_7 = arith.constant dense<0.000000e+00> : vector<128xf32>
    %14 = vector.multi_reduction <add>, %13, %cst_7 [1] : vector<128x128xf32> to vector<128xf32>
    %15 = vector.shape_cast %14 : vector<128xf32> to vector<128x1xf32>
    %16 = tpu.reciprocal %15 {approx = true} : vector<128x1xf32> -> vector<128x1xf32>
    %17 = vector.broadcast %16 : vector<128x1xf32> to vector<128x128xf32>
    %18 = arith.mulf %13, %17 : vector<128x128xf32>
    %cst_8 = arith.constant dense<0.000000e+00> : vector<128x16xf32>
    %19 = tpu.matmul %18, %5, %cst_8 {dimension_numbers = #tpu.dot_dimension_numbers<[1], [0], [0], [1], [0, 0, 1, 1], [], []>} : vector<128x128xf32>, vector<128x16xf32>, vector<128x16xf32> -> vector<128x16xf32>
    %c0_9 = arith.constant 0 : index
    %c0_10 = arith.constant 0 : index
    %20 = vector.load %arg4[%c0_9, %c0_10] : memref<16x128xf32, #tpu.memory_space<vmem>>, vector<16x128xf32>
    %cst_11 = arith.constant dense<0.000000e+00> : vector<128x128xf32>
    %21 = tpu.matmul %19, %20, %cst_11 {dimension_numbers = #tpu.dot_dimension_numbers<[1], [0], [0], [1], [0, 0, 1, 1], [], []>} : vector<128x16xf32>, vector<16x128xf32>, vector<128x128xf32> -> vector<128x128xf32>
    %c0_12 = arith.constant 0 : index
    %c0_13 = arith.constant 0 : index
    %22 = vector.load %arg5[%c0_12, %c0_13] : memref<128x128xf32, #tpu.memory_space<vmem>>, vector<128x128xf32>
    %23 = arith.mulf %21, %22 : vector<128x128xf32>
    %c0_14 = arith.constant 0 : index
    %c0_15 = arith.constant 0 : index
    %24 = vector.load %arg6[%c0_14, %c0_15] : memref<128x16xf32, #tpu.memory_space<vmem>>, vector<128x16xf32>
    %cst_16 = arith.constant dense<0.000000e+00> : vector<128x16xf32>
    %25 = tpu.matmul %23, %24, %cst_16 {dimension_numbers = #tpu.dot_dimension_numbers<[1], [0], [0], [1], [0, 0, 1, 1], [], []>} : vector<128x128xf32>, vector<128x16xf32>, vector<128x16xf32> -> vector<128x16xf32>
    %c0_17 = arith.constant 0 : index
    %c0_18 = arith.constant 0 : index
    %26 = vector.load %arg7[%c0_17, %c0_18] : memref<16x128xf32, #tpu.memory_space<vmem>>, vector<16x128xf32>
    %cst_19 = arith.constant dense<0.000000e+00> : vector<16x16xf32>
    %27 = tpu.matmul %26, %25, %cst_19 {dimension_numbers = #tpu.dot_dimension_numbers<[1], [0], [0], [1], [0, 0, 1, 1], [], []>} : vector<16x128xf32>, vector<128x16xf32>, vector<16x16xf32> -> vector<16x16xf32>
    %c0_20 = arith.constant 0 : index
    %c0_21 = arith.constant 0 : index
    %28 = vector.load %arg8[%c0_20, %c0_21] : memref<1x16xf32, #tpu.memory_space<vmem>>, vector<1x16xf32>
    %29 = vector.broadcast %28 : vector<1x16xf32> to vector<16x16xf32>
    %30 = arith.addf %27, %29 : vector<16x16xf32>
    %c0_22 = arith.constant 0 : index
    %c0_23 = arith.constant 0 : index
    %31 = vector.load %arg9[%c0_22, %c0_23] : memref<16x16xf32, #tpu.memory_space<vmem>>, vector<16x16xf32>
    tpu.vector_store %arg9[%c0_22, %c0_23], %30 {strides = array<i32>} : memref<16x16xf32, #tpu.memory_space<vmem>>, vector<16x16xf32>,
    return
  }
  func.func @transform_0(%arg0: i32) -> (i32, i32) {
    %c0_i32 = arith.constant 0 : i32
    %c0_i32_0 = arith.constant 0 : i32
    %c0_i32_1 = arith.constant 0 : i32
    return %c0_i32, %c0_i32_0 : i32, i32
  }
  func.func @transform_1(%arg0: i32) -> (i32, i32) {
    %c0_i32 = arith.constant 0 : i32
    %c0_i32_0 = arith.constant 0 : i32
    %c0_i32_1 = arith.constant 0 : i32
    return %c0_i32, %c0_i32_0 : i32, i32
  }
  func.func @transform_2(%arg0: i32) -> (i32, i32) {
    %c0_i32 = arith.constant 0 : i32
    %c0_i32_0 = arith.constant 0 : i32
    %c0_i32_1 = arith.constant 0 : i32
    return %c0_i32, %c0_i32_0 : i32, i32
  }
  func.func @transform_3(%arg0: i32) -> (i32, i32) {
    %c0_i32 = arith.constant 0 : i32
    %c0_i32_0 = arith.constant 0 : i32
    %c0_i32_1 = arith.constant 0 : i32
    return %c0_i32, %c0_i32_0 : i32, i32
  }
  func.func @transform_4(%arg0: i32) -> (i32, i32) {
    %c0_i32 = arith.constant 0 : i32
    %c0_i32_0 = arith.constant 0 : i32
    %c0_i32_1 = arith.constant 0 : i32
    return %c0_i32, %c0_i32_0 : i32, i32
  }
  func.func @transform_5(%arg0: i32) -> (i32, i32) {
    %c0_i32 = arith.constant 0 : i32
    %c0_i32_0 = arith.constant 0 : i32
    %c0_i32_1 = arith.constant 0 : i32
    return %c0_i32, %c0_i32_0 : i32, i32
  }
  func.func @transform_6(%arg0: i32) -> (i32, i32) {
    %c0_i32 = arith.constant 0 : i32
    %c0_i32_0 = arith.constant 0 : i32
    %c0_i32_1 = arith.constant 0 : i32
    return %c0_i32, %c0_i32_0 : i32, i32
  }
  func.func @transform_7(%arg0: i32) -> (i32, i32) {
    %c0_i32 = arith.constant 0 : i32
    %c0_i32_0 = arith.constant 0 : i32
    %c0_i32_1 = arith.constant 0 : i32
    return %c0_i32, %c0_i32_0 : i32, i32
  }
  func.func @transform_8(%arg0: i32) -> (i32, i32) {
    %c0_i32 = arith.constant 0 : i32
    %c0_i32_0 = arith.constant 0 : i32
    %c0_i32_1 = arith.constant 0 : i32
    return %c0_i32, %c0_i32_0 : i32, i32
  }
}

</mosaic_0001>

<llo_original>
// kernel: tpu_custom_call.1
$region0: #{tpu_custom_call.1}
  #allocation0 [shape = 'u32[]', space=smem, size = 0x4, offset = 0x4, fixed_abs, tag = 'smem constant byte address 0x4 - core index']
  #allocation1 [shape = 'u32[72,128]{1,0:T(1,128)}', space=vmem, size = 0x9000, scoped, tag = 'internal scratch']
  %s0 = inlined_call_operand.vmem [shape: f32[128,128], index: 0, kind: input, shape index: {}]
  %s1 = inlined_call_operand.vmem [shape: f32[128,48], index: 1, kind: input, shape index: {}]
  %s2 = inlined_call_operand.vmem [shape: f32[128,128], index: 2, kind: input, shape index: {}]
  %s3 = inlined_call_operand.vmem [shape: f32[16,128], index: 3, kind: input, shape index: {}]
  %s4 = inlined_call_operand.hbm [shape: f32[128,128], index: 4, kind: input, shape index: {}]
  %s5 = inlined_call_operand.vmem [shape: f32[128,16], index: 5, kind: input, shape index: {}]
  %s6 = inlined_call_operand.vmem [shape: f32[16,128], index: 6, kind: input, shape index: {}]
  %s7 = inlined_call_operand.vmem [shape: f32[1,16], index: 7, kind: input, shape index: {}]
  %s8 = inlined_call_operand.hbm [shape: f32[16,16], index: 8, kind: output, shape index: {}]
  %s9 = sld [smem:[#allocation0]]
  $region46: #{tpu_custom_call.1} parent=0
    _
  %s11 = ssub.s32 1, %s9
  %s12 = scalar_select 0, %s11, %s9
  $region1: #{tpu_custom_call.1} parent=0
    #allocation2 [shape = 'u8[65536]{0}', space=vmem, size = 0x10000, scoped, tag = 'input window, operand 4, single buffered']
    #allocation3 [shape = 's32[1]{0}', space=sflag, size = 0x4, scoped, tag = 'scoped memory for tpu_custom_call.1']
    #allocation4 [shape = 's32[1]{0}', space=sflag, size = 0x4, scoped, tag = 'scoped memory for tpu_custom_call.1']
    #allocation5 [shape = 'u8[8192]{0}', space=vmem, size = 0x2000, scoped, tag = 'output window, operand 0, single buffered']
    %13 = vsyncpa [#allocation3], 0
    %14 = vsyncpa [#allocation4], 0
    // Predicated region
    $region2: #{tpu_custom_call.1} parent=1 // pred_check
      _
    $region3: #{tpu_custom_call.1} parent=1 // pred_check_branch
      %16 = sbr.rel (0) target = $region5
    $region4: #{tpu_custom_call.1} parent=1 // pred_region
      _
    $region5: #{tpu_custom_call.1} parent=1 // pred_fallthru
      _
    // Predicated region
    $region6: #{tpu_custom_call.1} parent=1 // pred_check
      _
    $region7: #{tpu_custom_call.1} parent=1 // pred_check_branch
      %18 = sbr.rel (0) target = $region9
    $region8: #{tpu_custom_call.1} parent=1 // pred_region
      _
    $region9: #{tpu_custom_call.1} parent=1 // pred_fallthru
      _
    // Predicated region
    $region10: #{tpu_custom_call.1} parent=1 // pred_check
      _
    $region11: #{tpu_custom_call.1} parent=1 // pred_check_branch
      %20 = sbr.rel (0) target = $region13
    $region12: #{tpu_custom_call.1} parent=1 // pred_region
      _
    $region13: #{tpu_custom_call.1} parent=1 // pred_fallthru
      _
    // Predicated region
    $region14: #{tpu_custom_call.1} parent=1 // pred_check
      _
    $region15: #{tpu_custom_call.1} parent=1 // pred_check_branch
      %22 = sbr.rel (0) target = $region17
    $region16: #{tpu_custom_call.1} parent=1 // pred_region
      _
    $region17: #{tpu_custom_call.1} parent=1 // pred_fallthru
      _
    // Predicated region
    $region18: #{tpu_custom_call.1} parent=1 // pred_check
      _
    $region19: #{tpu_custom_call.1} parent=1 // pred_check_branch
      %24 = sbr.rel (0) target = $region21
    $region20: #{tpu_custom_call.1} parent=1 // pred_region
      %26 = vsyncadd [#allocation3], 0
      %s27 = sshll.u32 %s4, 4
      %s28 = int_to_ptr.hbm [resolvable:$true] %s27
      %s29 = sshll.u32 [#allocation2], 4
      %s30 = int_to_ptr.vmem [resolvable:$true] %s29
      %35 = dma.hbm_to_vmem [thread:$0]  %s28, 2048, %s30, [#allocation3], 128, 128, 8
    $region21: #{tpu_custom_call.1} parent=1 // pred_fallthru
      _
    // Predicated region
    $region22: #{tpu_custom_call.1} parent=1 // pred_check
      _
    $region23: #{tpu_custom_call.1} parent=1 // pred_check_branch
      %37 = sbr.rel (0) target = $region25
    $region24: #{tpu_custom_call.1} parent=1 // pred_region
      _
    $region25: #{tpu_custom_call.1} parent=1 // pred_fallthru
      _
    // Predicated region
    $region26: #{tpu_custom_call.1} parent=1 // pred_check
      _
    $region27: #{tpu_custom_call.1} parent=1 // pred_check_branch
      %39 = sbr.rel (0) target = $region29
    $region28: #{tpu_custom_call.1} parent=1 // pred_region
      _
    $region29: #{tpu_custom_call.1} parent=1 // pred_fallthru
      _
    // Predicated region
    $region30: #{tpu_custom_call.1} parent=1 // pred_check
      _
    $region31: #{tpu_custom_call.1} parent=1 // pred_check_branch
      %41 = sbr.rel (0) target = $region33
    $region32: #{tpu_custom_call.1} parent=1 // pred_region
      _
    $region33: #{tpu_custom_call.1} parent=1 // pred_fallthru
      _
    // Predicated region
    $region34: #{tpu_custom_call.1} parent=1 // pred_check
      _
    $region35: #{tpu_custom_call.1} parent=1 // pred_check_branch
      %43 = sbr.rel (0) target = $region37
    $region36: #{tpu_custom_call.1} parent=1 // pred_region
      %45 = dma.done [#allocation3], 2048
    $region37: #{tpu_custom_call.1} parent=1 // pred_fallthru
      _
    %v46 = vld [vmem:[%s0] sm:$0xff]
    %v47 = vld [vmem:[%s0 + $0x8] sm:$0xff]
    %v48 = vld [vmem:[%s0 + $0x10] sm:$0xff]
    %v49 = vld [vmem:[%s0 + $0x18] sm:$0xff]
    %v50 = vld [vmem:[%s0 + $0x20] sm:$0xff]
    %v51 = vld [vmem:[%s0 + $0x28] sm:$0xff]
    %v52 = vld [vmem:[%s0 + $0x30] sm:$0xff]
    %v53 = vld [vmem:[%s0 + $0x38] sm:$0xff]
    %v54 = vld [vmem:[%s0 + $0x40] sm:$0xff]
    %v55 = vld [vmem:[%s0 + $0x48] sm:$0xff]
    %v56 = vld [vmem:[%s0 + $0x50] sm:$0xff]
    %v57 = vld [vmem:[%s0 + $0x58] sm:$0xff]
    %v58 = vld [vmem:[%s0 + $0x60] sm:$0xff]
    %v59 = vld [vmem:[%s0 + $0x68] sm:$0xff]
    %v60 = vld [vmem:[%s0 + $0x70] sm:$0xff]
    %v61 = vld [vmem:[%s0 + $0x78] sm:$0xff]
    %v62 = vld [vmem:[%s1] sm:$0xff]
    %v63 = vld [vmem:[%s1 + $0x8] sm:$0xff]
    %v64 = vld [vmem:[%s1 + $0x10] sm:$0xff]
    %v65 = vld [vmem:[%s1 + $0x18] sm:$0xff]
    %v66 = vld [vmem:[%s1 + $0x20] sm:$0xff]
    %v67 = vld [vmem:[%s1 + $0x28] sm:$0xff]
    %v68 = vld [vmem:[%s1 + $0x30] sm:$0xff]
    %v69 = vld [vmem:[%s1 + $0x38] sm:$0xff]
    %v70 = vld [vmem:[%s1 + $0x40] sm:$0xff]
    %v71 = vld [vmem:[%s1 + $0x48] sm:$0xff]
    %v72 = vld [vmem:[%s1 + $0x50] sm:$0xff]
    %v73 = vld [vmem:[%s1 + $0x58] sm:$0xff]
    %v74 = vld [vmem:[%s1 + $0x60] sm:$0xff]
    %v75 = vld [vmem:[%s1 + $0x68] sm:$0xff]
    %v76 = vld [vmem:[%s1 + $0x70] sm:$0xff]
    %v77 = vld [vmem:[%s1 + $0x78] sm:$0xff]
    %78 = vmatpush.msra.mxu0 %v77
    %79 = vmatpush.msra.mxu0 %v76
    %80 = vmatpush.msra.mxu0 %v75
    %81 = vmatpush.msra.mxu0 %v74
    %82 = vmatpush.msra.mxu0 %v73
    %83 = vmatpush.msra.mxu0 %v72
    %84 = vmatpush.msra.mxu0 %v71
    %85 = vmatpush.msra.mxu0 %v70
    %86 = vmatpush.msra.mxu0 %v69
    %87 = vmatpush.msra.mxu0 %v68
    %88 = vmatpush.msra.mxu0 %v67
    %89 = vmatpush.msra.mxu0 %v66
    %90 = vmatpush.msra.mxu0 %v65
    %91 = vmatpush.msra.mxu0 %v64
    %92 = vmatpush.msra.mxu0 %v63
    %93 = vmatpush.msra.mxu0 %v62
    %94 = vmatmul.f32.gmra.mxu0 %v46
    %v95 = vpop.f32.mrf.mxu0
    %v96 = vadd.f32 0.0, %v95
    %97 = vmatmul.f32.gmra.mxu0 %v47
    %v98 = vpop.f32.mrf.mxu0
    %v99 = vadd.f32 0.0, %v98
    %100 = vmatmul.f32.gmra.mxu0 %v48
    %v101 = vpop.f32.mrf.mxu0
    %v102 = vadd.f32 0.0, %v101
    %103 = vmatmul.f32.gmra.mxu0 %v49
    %v104 = vpop.f32.mrf.mxu0
    %v105 = vadd.f32 0.0, %v104
    %106 = vmatmul.f32.gmra.mxu0 %v50
    %v107 = vpop.f32.mrf.mxu0
    %v108 = vadd.f32 0.0, %v107
    %109 = vmatmul.f32.gmra.mxu0 %v51
    %v110 = vpop.f32.mrf.mxu0
    %v111 = vadd.f32 0.0, %v110
    %112 = vmatmul.f32.gmra.mxu0 %v52
    %v113 = vpop.f32.mrf.mxu0
    %v114 = vadd.f32 0.0, %v113
    %115 = vmatmul.f32.gmra.mxu0 %v53
    %v116 = vpop.f32.mrf.mxu0
    %v117 = vadd.f32 0.0, %v116
    %118 = vmatmul.f32.gmra.mxu0 %v54
    %v119 = vpop.f32.mrf.mxu0
    %v120 = vadd.f32 0.0, %v119
    %121 = vmatmul.f32.gmra.mxu0 %v55
    %v122 = vpop.f32.mrf.mxu0
    %v123 = vadd.f32 0.0, %v122
    %124 = vmatmul.f32.gmra.mxu0 %v56
    %v125 = vpop.f32.mrf.mxu0
    %v126 = vadd.f32 0.0, %v125
    %127 = vmatmul.f32.gmra.mxu0 %v57
    %v128 = vpop.f32.mrf.mxu0
    %v129 = vadd.f32 0.0, %v128
    %130 = vmatmul.f32.gmra.mxu0 %v58
    %v131 = vpop.f32.mrf.mxu0
    %v132 = vadd.f32 0.0, %v131
    %133 = vmatmul.f32.gmra.mxu0 %v59
    %v134 = vpop.f32.mrf.mxu0
    %v135 = vadd.f32 0.0, %v134
    %136 = vmatmul.f32.gmra.mxu0 %v60
    %v137 = vpop.f32.mrf.mxu0
    %v138 = vadd.f32 0.0, %v137
    %139 = vmatmul.f32.gmra.mxu0 %v61
    %v140 = vpop.f32.mrf.mxu0
    %v141 = vadd.f32 0.0, %v140
    %142 = vdwg.mxu0
    %v143 = vld [vmem:[%s2] sm:$0xff]
    %v144 = vld [vmem:[%s2 + $0x8] sm:$0xff]
    %v145 = vld [vmem:[%s2 + $0x10] sm:$0xff]
    %v146 = vld [vmem:[%s2 + $0x18] sm:$0xff]
    %v147 = vld [vmem:[%s2 + $0x20] sm:$0xff]
    %v148 = vld [vmem:[%s2 + $0x28] sm:$0xff]
    %v149 = vld [vmem:[%s2 + $0x30] sm:$0xff]
    %v150 = vld [vmem:[%s2 + $0x38] sm:$0xff]
    %v151 = vld [vmem:[%s2 + $0x40] sm:$0xff]
    %v152 = vld [vmem:[%s2 + $0x48] sm:$0xff]
    %v153 = vld [vmem:[%s2 + $0x50] sm:$0xff]
    %v154 = vld [vmem:[%s2 + $0x58] sm:$0xff]
    %v155 = vld [vmem:[%s2 + $0x60] sm:$0xff]
    %v156 = vld [vmem:[%s2 + $0x68] sm:$0xff]
    %v157 = vld [vmem:[%s2 + $0x70] sm:$0xff]
    %v158 = vld [vmem:[%s2 + $0x78] sm:$0xff]
    %175 = vrot.lane.b32.xlu0 %v96, 112
    %v176 = vpop.permute.xlu0 %175
    %177 = vrot.lane.b32.xlu0 %v99, 112
    %v178 = vpop.permute.xlu0 %177
    %179 = vrot.lane.b32.xlu0 %v102, 112
    %v180 = vpop.permute.xlu0 %179
    %181 = vrot.lane.b32.xlu0 %v105, 112
    %v182 = vpop.permute.xlu0 %181
    %183 = vrot.lane.b32.xlu0 %v108, 112
    %v184 = vpop.permute.xlu0 %183
    %185 = vrot.lane.b32.xlu0 %v111, 112
    %v186 = vpop.permute.xlu0 %185
    %187 = vrot.lane.b32.xlu0 %v114, 112
    %v188 = vpop.permute.xlu0 %187
    %189 = vrot.lane.b32.xlu0 %v117, 112
    %v190 = vpop.permute.xlu0 %189
    %191 = vrot.lane.b32.xlu0 %v120, 112
    %v192 = vpop.permute.xlu0 %191
    %193 = vrot.lane.b32.xlu0 %v123, 112
    %v194 = vpop.permute.xlu0 %193
    %195 = vrot.lane.b32.xlu0 %v126, 112
    %v196 = vpop.permute.xlu0 %195
    %197 = vrot.lane.b32.xlu0 %v129, 112
    %v198 = vpop.permute.xlu0 %197
    %199 = vrot.lane.b32.xlu0 %v132, 112
    %v200 = vpop.permute.xlu0 %199
    %201 = vrot.lane.b32.xlu0 %v135, 112
    %v202 = vpop.permute.xlu0 %201
    %203 = vrot.lane.b32.xlu0 %v138, 112
    %v204 = vpop.permute.xlu0 %203
    %205 = vrot.lane.b32.xlu0 %v141, 112
    %v206 = vpop.permute.xlu0 %205
    %vm207 = vcmask 130048
    %v208 = vsel %vm207, %v96, 0
    %v210 = vsel %vm207, %v99, 0
    %v212 = vsel %vm207, %v102, 0
    %v214 = vsel %vm207, %v105, 0
    %v216 = vsel %vm207, %v108, 0
    %v218 = vsel %vm207, %v111, 0
    %v220 = vsel %vm207, %v114, 0
    %v222 = vsel %vm207, %v117, 0
    %v224 = vsel %vm207, %v120, 0
    %v226 = vsel %vm207, %v123, 0
    %v228 = vsel %vm207, %v126, 0
    %v230 = vsel %vm207, %v129, 0
    %v232 = vsel %vm207, %v132, 0
    %v234 = vsel %vm207, %v135, 0
    %v236 = vsel %vm207, %v138, 0
    %v238 = vsel %vm207, %v141, 0
    %v240 = vsel %vm207, %v176, 0
    %v242 = vsel %vm207, %v178, 0
    %v244 = vsel %vm207, %v180, 0
    %v246 = vsel %vm207, %v182, 0
    %v248 = vsel %vm207, %v184, 0
    %v250 = vsel %vm207, %v186, 0
    %v252 = vsel %vm207, %v188, 0
    %v254 = vsel %vm207, %v190, 0
    %v256 = vsel %vm207, %v192, 0
    %v258 = vsel %vm207, %v194, 0
    %v260 = vsel %vm207, %v196, 0
    %v262 = vsel %vm207, %v198, 0
    %v264 = vsel %vm207, %v200, 0
    %v266 = vsel %vm207, %v202, 0
    %v268 = vsel %vm207, %v204, 0
    %v270 = vsel %vm207, %v206, 0
    %272 = vmatpush.xpose.msra.mxu0 %v270
    %273 = vmatpush.xpose.msra.mxu0 %v268
    %274 = vmatpush.xpose.msra.mxu0 %v266
    %275 = vmatpush.xpose.msra.mxu0 %v264
    %276 = vmatpush.xpose.msra.mxu0 %v262
    %277 = vmatpush.xpose.msra.mxu0 %v260
    %278 = vmatpush.xpose.msra.mxu0 %v258
    %279 = vmatpush.xpose.msra.mxu0 %v256
    %280 = vmatpush.xpose.msra.mxu0 %v254
    %281 = vmatpush.xpose.msra.mxu0 %v252
    %282 = vmatpush.xpose.msra.mxu0 %v250
    %283 = vmatpush.xpose.msra.mxu0 %v248
    %284 = vmatpush.xpose.msra.mxu0 %v246
    %285 = vmatpush.xpose.msra.mxu0 %v244
    %286 = vmatpush.xpose.msra.mxu0 %v242
    %287 = vmatpush.xpose.msra.mxu0 %v240
    %288 = vmatmul.f32.gmra.mxu0 %v208
    %v289 = vpop.f32.mrf.mxu0
    %v290 = vadd.f32 %v143, %v289
    %291 = vmatmul.f32.gmra.mxu0 %v210
    %v292 = vpop.f32.mrf.mxu0
    %v293 = vadd.f32 %v144, %v292
    %294 = vmatmul.f32.gmra.mxu0 %v212
    %v295 = vpop.f32.mrf.mxu0
    %v296 = vadd.f32 %v145, %v295
    %297 = vmatmul.f32.gmra.mxu0 %v214
    %v298 = vpop.f32.mrf.mxu0
    %v299 = vadd.f32 %v146, %v298
    %300 = vmatmul.f32.gmra.mxu0 %v216
    %v301 = vpop.f32.mrf.mxu0
    %v302 = vadd.f32 %v147, %v301
    %303 = vmatmul.f32.gmra.mxu0 %v218
    %v304 = vpop.f32.mrf.mxu0
    %v305 = vadd.f32 %v148, %v304
    %306 = vmatmul.f32.gmra.mxu0 %v220
    %v307 = vpop.f32.mrf.mxu0
    %v308 = vadd.f32 %v149, %v307
    %309 = vmatmul.f32.gmra.mxu0 %v222
    %v310 = vpop.f32.mrf.mxu0
    %v311 = vadd.f32 %v150, %v310
    %312 = vmatmul.f32.gmra.mxu0 %v224
    %v313 = vpop.f32.mrf.mxu0
    %v314 = vadd.f32 %v151, %v313
    %315 = vmatmul.f32.gmra.mxu0 %v226
    %v316 = vpop.f32.mrf.mxu0
    %v317 = vadd.f32 %v152, %v316
    %318 = vmatmul.f32.gmra.mxu0 %v228
    %v319 = vpop.f32.mrf.mxu0
    %v320 = vadd.f32 %v153, %v319
    %321 = vmatmul.f32.gmra.mxu0 %v230
    %v322 = vpop.f32.mrf.mxu0
    %v323 = vadd.f32 %v154, %v322
    %324 = vmatmul.f32.gmra.mxu0 %v232
    %v325 = vpop.f32.mrf.mxu0
    %v326 = vadd.f32 %v155, %v325
    %327 = vmatmul.f32.gmra.mxu0 %v234
    %v328 = vpop.f32.mrf.mxu0
    %v329 = vadd.f32 %v156, %v328
    %330 = vmatmul.f32.gmra.mxu0 %v236
    %v331 = vpop.f32.mrf.mxu0
    %v332 = vadd.f32 %v157, %v331
    %333 = vmatmul.f32.gmra.mxu0 %v238
    %v334 = vpop.f32.mrf.mxu0
    %v335 = vadd.f32 %v158, %v334
    %336 = vdwg.mxu0
    %337 = vmax.xlane.f32.xlu0 %v290
    %v338 = vpop.xlane.xlu0 %337
    %339 = vmax.xlane.f32.xlu0 %v293
    %v340 = vpop.xlane.xlu0 %339
    %341 = vmax.xlane.f32.xlu0 %v296
    %v342 = vpop.xlane.xlu0 %341
    %343 = vmax.xlane.f32.xlu0 %v299
    %v344 = vpop.xlane.xlu0 %343
    %345 = vmax.xlane.f32.xlu0 %v302
    %v346 = vpop.xlane.xlu0 %345
    %347 = vmax.xlane.f32.xlu0 %v305
    %v348 = vpop.xlane.xlu0 %347
    %349 = vmax.xlane.f32.xlu0 %v308
    %v350 = vpop.xlane.xlu0 %349
    %351 = vmax.xlane.f32.xlu0 %v311
    %v352 = vpop.xlane.xlu0 %351
    %353 = vmax.xlane.f32.xlu0 %v314
    %v354 = vpop.xlane.xlu0 %353
    %355 = vmax.xlane.f32.xlu0 %v317
    %v356 = vpop.xlane.xlu0 %355
    %357 = vmax.xlane.f32.xlu0 %v320
    %v358 = vpop.xlane.xlu0 %357
    %359 = vmax.xlane.f32.xlu0 %v323
    %v360 = vpop.xlane.xlu0 %359
    %361 = vmax.xlane.f32.xlu0 %v326
    %v362 = vpop.xlane.xlu0 %361
    %363 = vmax.xlane.f32.xlu0 %v329
    %v364 = vpop.xlane.xlu0 %363
    %365 = vmax.xlane.f32.xlu0 %v332
    %v366 = vpop.xlane.xlu0 %365
    %367 = vmax.xlane.f32.xlu0 %v335
    %v368 = vpop.xlane.xlu0 %367
    %v369 = vsub.f32 %v290, %v338
    %v370 = vsub.f32 %v293, %v340
    %v371 = vsub.f32 %v296, %v342
    %v372 = vsub.f32 %v299, %v344
    %v373 = vsub.f32 %v302, %v346
    %v374 = vsub.f32 %v305, %v348
    %v375 = vsub.f32 %v308, %v350
    %v376 = vsub.f32 %v311, %v352
    %v377 = vsub.f32 %v314, %v354
    %v378 = vsub.f32 %v317, %v356
    %v379 = vsub.f32 %v320, %v358
    %v380 = vsub.f32 %v323, %v360
    %v381 = vsub.f32 %v326, %v362
    %v382 = vsub.f32 %v329, %v364
    %v383 = vsub.f32 %v332, %v366
    %v384 = vsub.f32 %v335, %v368
    %v385 = vmul.f32 %v369, 1.442695
    %v386 = vpow.pop %v385
    %v387 = vmul.f32 %v370, 1.442695
    %v388 = vpow.pop %v387
    %v389 = vmul.f32 %v371, 1.442695
    %v390 = vpow.pop %v389
    %v391 = vmul.f32 %v372, 1.442695
    %v392 = vpow.pop %v391
    %v393 = vmul.f32 %v373, 1.442695
    %v394 = vpow.pop %v393
    %v395 = vmul.f32 %v374, 1.442695
    %v396 = vpow.pop %v395
    %v397 = vmul.f32 %v375, 1.442695
    %v398 = vpow.pop %v397
    %v399 = vmul.f32 %v376, 1.442695
    %v400 = vpow.pop %v399
    %v401 = vmul.f32 %v377, 1.442695
    %v402 = vpow.pop %v401
    %v403 = vmul.f32 %v378, 1.442695
    %v404 = vpow.pop %v403
    %v405 = vmul.f32 %v379, 1.442695
    %v406 = vpow.pop %v405
    %v407 = vmul.f32 %v380, 1.442695
    %v408 = vpow.pop %v407
    %v409 = vmul.f32 %v381, 1.442695
    %v410 = vpow.pop %v409
    %v411 = vmul.f32 %v382, 1.442695
    %v412 = vpow.pop %v411
    %v413 = vmul.f32 %v383, 1.442695
    %v414 = vpow.pop %v413
    %v415 = vmul.f32 %v384, 1.442695
    %v416 = vpow.pop %v415
    %417 = vadd.xlane.f32.xlu0 %v386
    %v418 = vpop.xlane.xlu0 %417
    %419 = vadd.xlane.f32.xlu0 %v388
    %v420 = vpop.xlane.xlu0 %419
    %421 = vadd.xlane.f32.xlu0 %v390
    %v422 = vpop.xlane.xlu0 %421
    %423 = vadd.xlane.f32.xlu0 %v392
    %v424 = vpop.xlane.xlu0 %423
    %425 = vadd.xlane.f32.xlu0 %v394
    %v426 = vpop.xlane.xlu0 %425
    %427 = vadd.xlane.f32.xlu0 %v396
    %v428 = vpop.xlane.xlu0 %427
    %429 = vadd.xlane.f32.xlu0 %v398
    %v430 = vpop.xlane.xlu0 %429
    %431 = vadd.xlane.f32.xlu0 %v400
    %v432 = vpop.xlane.xlu0 %431
    %433 = vadd.xlane.f32.xlu0 %v402
    %v434 = vpop.xlane.xlu0 %433
    %435 = vadd.xlane.f32.xlu0 %v404
    %v436 = vpop.xlane.xlu0 %435
    %437 = vadd.xlane.f32.xlu0 %v406
    %v438 = vpop.xlane.xlu0 %437
    %439 = vadd.xlane.f32.xlu0 %v408
    %v440 = vpop.xlane.xlu0 %439
    %441 = vadd.xlane.f32.xlu0 %v410
    %v442 = vpop.xlane.xlu0 %441
    %443 = vadd.xlane.f32.xlu0 %v412
    %v444 = vpop.xlane.xlu0 %443
    %445 = vadd.xlane.f32.xlu0 %v414
    %v446 = vpop.xlane.xlu0 %445
    %447 = vadd.xlane.f32.xlu0 %v416
    %v448 = vpop.xlane.xlu0 %447
    %v449 = vrcp.pop %v418
    %v450 = vrcp.pop %v420
    %v451 = vrcp.pop %v422
    %v452 = vrcp.pop %v424
    %v453 = vrcp.pop %v426
    %v454 = vrcp.pop %v428
    %v455 = vrcp.pop %v430
    %v456 = vrcp.pop %v432
    %v457 = vrcp.pop %v434
    %v458 = vrcp.pop %v436
    %v459 = vrcp.pop %v438
    %v460 = vrcp.pop %v440
    %v461 = vrcp.pop %v442
    %v462 = vrcp.pop %v444
    %v463 = vrcp.pop %v446
    %v464 = vrcp.pop %v448
    %v465 = vmul.f32 %v386, %v449
    %v466 = vmul.f32 %v388, %v450
    %v467 = vmul.f32 %v390, %v451
    %v468 = vmul.f32 %v392, %v452
    %v469 = vmul.f32 %v394, %v453
    %v470 = vmul.f32 %v396, %v454
    %v471 = vmul.f32 %v398, %v455
    %v472 = vmul.f32 %v400, %v456
    %v473 = vmul.f32 %v402, %v457
    %v474 = vmul.f32 %v404, %v458
    %v475 = vmul.f32 %v406, %v459
    %v476 = vmul.f32 %v408, %v460
    %v477 = vmul.f32 %v410, %v461
    %v478 = vmul.f32 %v412, %v462
    %v479 = vmul.f32 %v414, %v463
    %v480 = vmul.f32 %v416, %v464
    %481 = vrot.lane.b32.xlu0 %v96, 96
    %v482 = vpop.permute.xlu0 %481
    %483 = vrot.lane.b32.xlu0 %v99, 96
    %v484 = vpop.permute.xlu0 %483
    %485 = vrot.lane.b32.xlu0 %v102, 96
    %v486 = vpop.permute.xlu0 %485
    %487 = vrot.lane.b32.xlu0 %v105, 96
    %v488 = vpop.permute.xlu0 %487
    %489 = vrot.lane.b32.xlu0 %v108, 96
    %v490 = vpop.permute.xlu0 %489
    %491 = vrot.lane.b32.xlu0 %v111, 96
    %v492 = vpop.permute.xlu0 %491
    %493 = vrot.lane.b32.xlu0 %v114, 96
    %v494 = vpop.permute.xlu0 %493
    %495 = vrot.lane.b32.xlu0 %v117, 96
    %v496 = vpop.permute.xlu0 %495
    %497 = vrot.lane.b32.xlu0 %v120, 96
    %v498 = vpop.permute.xlu0 %497
    %499 = vrot.lane.b32.xlu0 %v123, 96
    %v500 = vpop.permute.xlu0 %499
    %501 = vrot.lane.b32.xlu0 %v126, 96
    %v502 = vpop.permute.xlu0 %501
    %503 = vrot.lane.b32.xlu0 %v129, 96
    %v504 = vpop.permute.xlu0 %503
    %505 = vrot.lane.b32.xlu0 %v132, 96
    %v506 = vpop.permute.xlu0 %505
    %507 = vrot.lane.b32.xlu0 %v135, 96
    %v508 = vpop.permute.xlu0 %507
    %509 = vrot.lane.b32.xlu0 %v138, 96
    %v510 = vpop.permute.xlu0 %509
    %511 = vrot.lane.b32.xlu0 %v141, 96
    %v512 = vpop.permute.xlu0 %511
    %529 = vmatpush.msra.mxu0 %v512
    %530 = vmatpush.msra.mxu0 %v510
    %531 = vmatpush.msra.mxu0 %v508
    %532 = vmatpush.msra.mxu0 %v506
    %533 = vmatpush.msra.mxu0 %v504
    %534 = vmatpush.msra.mxu0 %v502
    %535 = vmatpush.msra.mxu0 %v500
    %536 = vmatpush.msra.mxu0 %v498
    %537 = vmatpush.msra.mxu0 %v496
    %538 = vmatpush.msra.mxu0 %v494
    %539 = vmatpush.msra.mxu0 %v492
    %540 = vmatpush.msra.mxu0 %v490
    %541 = vmatpush.msra.mxu0 %v488
    %542 = vmatpush.msra.mxu0 %v486
    %543 = vmatpush.msra.mxu0 %v484
    %544 = vmatpush.msra.mxu0 %v482
    %545 = vmatmul.f32.gmra.mxu0 %v465
    %v546 = vpop.f32.mrf.mxu0
    %v547 = vadd.f32 0.0, %v546
    %548 = vmatmul.f32.gmra.mxu0 %v466
    %v549 = vpop.f32.mrf.mxu0
    %v550 = vadd.f32 0.0, %v549
    %551 = vmatmul.f32.gmra.mxu0 %v467
    %v552 = vpop.f32.mrf.mxu0
    %v553 = vadd.f32 0.0, %v552
    %554 = vmatmul.f32.gmra.mxu0 %v468
    %v555 = vpop.f32.mrf.mxu0
    %v556 = vadd.f32 0.0, %v555
    %557 = vmatmul.f32.gmra.mxu0 %v469
    %v558 = vpop.f32.mrf.mxu0
    %v559 = vadd.f32 0.0, %v558
    %560 = vmatmul.f32.gmra.mxu0 %v470
    %v561 = vpop.f32.mrf.mxu0
    %v562 = vadd.f32 0.0, %v561
    %563 = vmatmul.f32.gmra.mxu0 %v471
    %v564 = vpop.f32.mrf.mxu0
    %v565 = vadd.f32 0.0, %v564
    %566 = vmatmul.f32.gmra.mxu0 %v472
    %v567 = vpop.f32.mrf.mxu0
    %v568 = vadd.f32 0.0, %v567
    %569 = vmatmul.f32.gmra.mxu0 %v473
    %v570 = vpop.f32.mrf.mxu0
    %v571 = vadd.f32 0.0, %v570
    %572 = vmatmul.f32.gmra.mxu0 %v474
    %v573 = vpop.f32.mrf.mxu0
    %v574 = vadd.f32 0.0, %v573
    %575 = vmatmul.f32.gmra.mxu0 %v475
    %v576 = vpop.f32.mrf.mxu0
    %v577 = vadd.f32 0.0, %v576
    %578 = vmatmul.f32.gmra.mxu0 %v476
    %v579 = vpop.f32.mrf.mxu0
    %v580 = vadd.f32 0.0, %v579
    %581 = vmatmul.f32.gmra.mxu0 %v477
    %v582 = vpop.f32.mrf.mxu0
    %v583 = vadd.f32 0.0, %v582
    %584 = vmatmul.f32.gmra.mxu0 %v478
    %v585 = vpop.f32.mrf.mxu0
    %v586 = vadd.f32 0.0, %v585
    %587 = vmatmul.f32.gmra.mxu0 %v479
    %v588 = vpop.f32.mrf.mxu0
    %v589 = vadd.f32 0.0, %v588
    %590 = vmatmul.f32.gmra.mxu0 %v480
    %v591 = vpop.f32.mrf.mxu0
    %v592 = vadd.f32 0.0, %v591
    %593 = vdwg.mxu0
    %v594 = vld [vmem:[%s3] sm:$0xff]
    %v595 = vld [vmem:[%s3 + $0x8] sm:$0xff]
    %v597 = vsel %vm207, %v547, 0
    %v600 = vsel %vm207, %v550, 0
    %v603 = vsel %vm207, %v553, 0
    %v606 = vsel %vm207, %v556, 0
    %v609 = vsel %vm207, %v559, 0
    %v612 = vsel %vm207, %v562, 0
    %v615 = vsel %vm207, %v565, 0
    %v618 = vsel %vm207, %v568, 0
    %v621 = vsel %vm207, %v571, 0
    %v624 = vsel %vm207, %v574, 0
    %v627 = vsel %vm207, %v577, 0
    %v630 = vsel %vm207, %v580, 0
    %v633 = vsel %vm207, %v583, 0
    %v636 = vsel %vm207, %v586, 0
    %v639 = vsel %vm207, %v589, 0
    %v642 = vsel %vm207, %v592, 0
    %644 = vmatpush.msra.mxu0 0.0
    %645 = vmatpush.msra.mxu0 0.0
    %646 = vmatpush.msra.mxu0 0.0
    %647 = vmatpush.msra.mxu0 0.0
    %648 = vmatpush.msra.mxu0 0.0
    %649 = vmatpush.msra.mxu0 0.0
    %650 = vmatpush.msra.mxu0 0.0
    %651 = vmatpush.msra.mxu0 0.0
    %652 = vmatpush.msra.mxu0 0.0
    %653 = vmatpush.msra.mxu0 0.0
    %654 = vmatpush.msra.mxu0 0.0
    %655 = vmatpush.msra.mxu0 0.0
    %656 = vmatpush.msra.mxu0 0.0
    %657 = vmatpush.msra.mxu0 0.0
    %658 = vmatpush.msra.mxu0 %v595
    %659 = vmatpush.msra.mxu0 %v594
    %660 = vmatmul.f32.gmra.mxu0 %v597
    %v661 = vpop.f32.mrf.mxu0
    %v662 = vadd.f32 0.0, %v661
    %663 = vmatmul.f32.gmra.mxu0 %v600
    %v664 = vpop.f32.mrf.mxu0
    %v665 = vadd.f32 0.0, %v664
    %666 = vmatmul.f32.gmra.mxu0 %v603
    %v667 = vpop.f32.mrf.mxu0
    %v668 = vadd.f32 0.0, %v667
    %669 = vmatmul.f32.gmra.mxu0 %v606
    %v670 = vpop.f32.mrf.mxu0
    %v671 = vadd.f32 0.0, %v670
    %672 = vmatmul.f32.gmra.mxu0 %v609
    %v673 = vpop.f32.mrf.mxu0
    %v674 = vadd.f32 0.0, %v673
    %675 = vmatmul.f32.gmra.mxu0 %v612
    %v676 = vpop.f32.mrf.mxu0
    %v677 = vadd.f32 0.0, %v676
    %678 = vmatmul.f32.gmra.mxu0 %v615
    %v679 = vpop.f32.mrf.mxu0
    %v680 = vadd.f32 0.0, %v679
    %681 = vmatmul.f32.gmra.mxu0 %v618
    %v682 = vpop.f32.mrf.mxu0
    %v683 = vadd.f32 0.0, %v682
    %684 = vmatmul.f32.gmra.mxu0 %v621
    %v685 = vpop.f32.mrf.mxu0
    %v686 = vadd.f32 0.0, %v685
    %687 = vmatmul.f32.gmra.mxu0 %v624
    %v688 = vpop.f32.mrf.mxu0
    %v689 = vadd.f32 0.0, %v688
    %690 = vmatmul.f32.gmra.mxu0 %v627
    %v691 = vpop.f32.mrf.mxu0
    %v692 = vadd.f32 0.0, %v691
    %693 = vmatmul.f32.gmra.mxu0 %v630
    %v694 = vpop.f32.mrf.mxu0
    %v695 = vadd.f32 0.0, %v694
    %696 = vmatmul.f32.gmra.mxu0 %v633
    %v697 = vpop.f32.mrf.mxu0
    %v698 = vadd.f32 0.0, %v697
    %699 = vmatmul.f32.gmra.mxu0 %v636
    %v700 = vpop.f32.mrf.mxu0
    %v701 = vadd.f32 0.0, %v700
    %702 = vmatmul.f32.gmra.mxu0 %v639
    %v703 = vpop.f32.mrf.mxu0
    %v704 = vadd.f32 0.0, %v703
    %705 = vmatmul.f32.gmra.mxu0 %v642
    %v706 = vpop.f32.mrf.mxu0
    %v707 = vadd.f32 0.0, %v706
    %708 = vdwg.mxu0
    %v709 = vld [vmem:[#allocation2] sm:$0xff]
    %v710 = vld [vmem:[#allocation2 + $0x8] sm:$0xff]
    %v711 = vld [vmem:[#allocation2 + $0x10] sm:$0xff]
    %v712 = vld [vmem:[#allocation2 + $0x18] sm:$0xff]
    %v713 = vld [vmem:[#allocation2 + $0x20] sm:$0xff]
    %v714 = vld [vmem:[#allocation2 + $0x28] sm:$0xff]
    %v715 = vld [vmem:[#allocation2 + $0x30] sm:$0xff]
    %v716 = vld [vmem:[#allocation2 + $0x38] sm:$0xff]
    %v717 = vld [vmem:[#allocation2 + $0x40] sm:$0xff]
    %v718 = vld [vmem:[#allocation2 + $0x48] sm:$0xff]
    %v719 = vld [vmem:[#allocation2 + $0x50] sm:$0xff]
    %v720 = vld [vmem:[#allocation2 + $0x58] sm:$0xff]
    %v721 = vld [vmem:[#allocation2 + $0x60] sm:$0xff]
    %v722 = vld [vmem:[#allocation2 + $0x68] sm:$0xff]
    %v723 = vld [vmem:[#allocation2 + $0x70] sm:$0xff]
    %v724 = vld [vmem:[#allocation2 + $0x78] sm:$0xff]
    %v725 = vmul.f32 %v662, %v709
    %v726 = vmul.f32 %v665, %v710
    %v727 = vmul.f32 %v668, %v711
    %v728 = vmul.f32 %v671, %v712
    %v729 = vmul.f32 %v674, %v713
    %v730 = vmul.f32 %v677, %v714
    %v731 = vmul.f32 %v680, %v715
    %v732 = vmul.f32 %v683, %v716
    %v733 = vmul.f32 %v686, %v717
    %v734 = vmul.f32 %v689, %v718
    %v735 = vmul.f32 %v692, %v719
    %v736 = vmul.f32 %v695, %v720
    %v737 = vmul.f32 %v698, %v721
    %v738 = vmul.f32 %v701, %v722
    %v739 = vmul.f32 %v704, %v723
    %v740 = vmul.f32 %v707, %v724
    %v741 = vld [vmem:[%s5] sm:$0xff]
    %v742 = vld [vmem:[%s5 + $0x8] sm:$0xff]
    %v743 = vld [vmem:[%s5 + $0x10] sm:$0xff]
    %v744 = vld [vmem:[%s5 + $0x18] sm:$0xff]
    %v745 = vld [vmem:[%s5 + $0x20] sm:$0xff]
    %v746 = vld [vmem:[%s5 + $0x28] sm:$0xff]
    %v747 = vld [vmem:[%s5 + $0x30] sm:$0xff]
    %v748 = vld [vmem:[%s5 + $0x38] sm:$0xff]
    %v749 = vld [vmem:[%s5 + $0x40] sm:$0xff]
    %v750 = vld [vmem:[%s5 + $0x48] sm:$0xff]
    %v751 = vld [vmem:[%s5 + $0x50] sm:$0xff]
    %v752 = vld [vmem:[%s5 + $0x58] sm:$0xff]
    %v753 = vld [vmem:[%s5 + $0x60] sm:$0xff]
    %v754 = vld [vmem:[%s5 + $0x68] sm:$0xff]
    %v755 = vld [vmem:[%s5 + $0x70] sm:$0xff]
    %v756 = vld [vmem:[%s5 + $0x78] sm:$0xff]
    %757 = vmatpush.msra.mxu0 %v756
    %758 = vmatpush.msra.mxu0 %v755
    %759 = vmatpush.msra.mxu0 %v754
    %760 = vmatpush.msra.mxu0 %v753
    %761 = vmatpush.msra.mxu0 %v752
    %762 = vmatpush.msra.mxu0 %v751
    %763 = vmatpush.msra.mxu0 %v750
    %764 = vmatpush.msra.mxu0 %v749
    %765 = vmatpush.msra.mxu0 %v748
    %766 = vmatpush.msra.mxu0 %v747
    %767 = vmatpush.msra.mxu0 %v746
    %768 = vmatpush.msra.mxu0 %v745
    %769 = vmatpush.msra.mxu0 %v744
    %770 = vmatpush.msra.mxu0 %v743
    %771 = vmatpush.msra.mxu0 %v742
    %772 = vmatpush.msra.mxu0 %v741
    %773 = vmatmul.f32.gmra.mxu0 %v725
    %v774 = vpop.f32.mrf.mxu0
    %v775 = vadd.f32 0.0, %v774
    %776 = vmatmul.f32.gmra.mxu0 %v726
    %v777 = vpop.f32.mrf.mxu0
    %v778 = vadd.f32 0.0, %v777
    %779 = vmatmul.f32.gmra.mxu0 %v727
    %v780 = vpop.f32.mrf.mxu0
    %v781 = vadd.f32 0.0, %v780
    %782 = vmatmul.f32.gmra.mxu0 %v728
    %v783 = vpop.f32.mrf.mxu0
    %v784 = vadd.f32 0.0, %v783
    %785 = vmatmul.f32.gmra.mxu0 %v729
    %v786 = vpop.f32.mrf.mxu0
    %v787 = vadd.f32 0.0, %v786
    %788 = vmatmul.f32.gmra.mxu0 %v730
    %v789 = vpop.f32.mrf.mxu0
    %v790 = vadd.f32 0.0, %v789
    %791 = vmatmul.f32.gmra.mxu0 %v731
    %v792 = vpop.f32.mrf.mxu0
    %v793 = vadd.f32 0.0, %v792
    %794 = vmatmul.f32.gmra.mxu0 %v732
    %v795 = vpop.f32.mrf.mxu0
    %v796 = vadd.f32 0.0, %v795
    %797 = vmatmul.f32.gmra.mxu0 %v733
    %v798 = vpop.f32.mrf.mxu0
    %v799 = vadd.f32 0.0, %v798
    %800 = vmatmul.f32.gmra.mxu0 %v734
    %v801 = vpop.f32.mrf.mxu0
    %v802 = vadd.f32 0.0, %v801
    %803 = vmatmul.f32.gmra.mxu0 %v735
    %v804 = vpop.f32.mrf.mxu0
    %v805 = vadd.f32 0.0, %v804
    %806 = vmatmul.f32.gmra.mxu0 %v736
    %v807 = vpop.f32.mrf.mxu0
    %v808 = vadd.f32 0.0, %v807
    %809 = vmatmul.f32.gmra.mxu0 %v737
    %v810 = vpop.f32.mrf.mxu0
    %v811 = vadd.f32 0.0, %v810
    %812 = vmatmul.f32.gmra.mxu0 %v738
    %v813 = vpop.f32.mrf.mxu0
    %v814 = vadd.f32 0.0, %v813
    %815 = vmatmul.f32.gmra.mxu0 %v739
    %v816 = vpop.f32.mrf.mxu0
    %v817 = vadd.f32 0.0, %v816
    %818 = vmatmul.f32.gmra.mxu0 %v740
    %v819 = vpop.f32.mrf.mxu0
    %v820 = vadd.f32 0.0, %v819
    %821 = vdwg.mxu0
    %v822 = vld [vmem:[%s6] sm:$0xff]
    %v823 = vld [vmem:[%s6 + $0x8] sm:$0xff]
    %v824 = vld [vmem:[%s7] sm:$0x1]
    %v826 = vperm.slane %v824, 0
    %828 = vmatpush.msra.mxu0 %v820
    %829 = vmatpush.msra.mxu0 %v817
    %830 = vmatpush.msra.mxu0 %v814
    %831 = vmatpush.msra.mxu0 %v811
    %832 = vmatpush.msra.mxu0 %v808
    %833 = vmatpush.msra.mxu0 %v805
    %834 = vmatpush.msra.mxu0 %v802
    %835 = vmatpush.msra.mxu0 %v799
    %836 = vmatpush.msra.mxu0 %v796
    %837 = vmatpush.msra.mxu0 %v793
    %838 = vmatpush.msra.mxu0 %v790
    %839 = vmatpush.msra.mxu0 %v787
    %840 = vmatpush.msra.mxu0 %v784
    %841 = vmatpush.msra.mxu0 %v781
    %842 = vmatpush.msra.mxu0 %v778
    %843 = vmatpush.msra.mxu0 %v775
    %844 = vmatmul.f32.gmra.mxu0 %v822
    %v845 = vpop.f32.mrf.mxu0
    %v846 = vadd.f32 %v826, %v845
    %847 = vmatmul.f32.gmra.mxu0 %v823
    %v848 = vpop.f32.mrf.mxu0
    %v849 = vadd.f32 %v826, %v848
    %850 = vdwg.mxu0
    %851 = vst.msk [vmem:[#allocation5] sm:$0xff] %vm207, %v846
    %852 = vst.msk [vmem:[#allocation5 + $0x8] sm:$0xff] %vm207, %v849
    // Predicated region
    $region38: #{tpu_custom_call.1} parent=1 // pred_check
      _
    $region39: #{tpu_custom_call.1} parent=1 // pred_check_branch
      %854 = sbr.rel (0) target = $region41
    $region40: #{tpu_custom_call.1} parent=1 // pred_region
      %856 = vsyncadd [#allocation4], 0
      %s857 = sshll.u32 [#allocation5], 4
      %s858 = int_to_ptr.vmem [resolvable:$true] %s857
      %s859 = sshll.u32 %s8, 4
      %s860 = int_to_ptr.hbm [resolvable:$true] %s859
      %865 = dma.vmem_to_hbm [thread:$0]  %s858, 256, %s860, [#allocation4], 128, 128, 8
    $region41: #{tpu_custom_call.1} parent=1 // pred_fallthru
      _
    // Predicated region
    $region42: #{tpu_custom_call.1} parent=1 // pred_check
      _
    $region43: #{tpu_custom_call.1} parent=1 // pred_check_branch
      %867 = sbr.rel (0) target = $region45
    $region44: #{tpu_custom_call.1} parent=1 // pred_region
      %869 = dma.done [#allocation4], 256
    $region45: #{tpu_custom_call.1} parent=1 // pred_fallthru
      _
    %870 = vsyncpa [#allocation3], 1
    %871 = vsyncpa [#allocation4], 1

</llo_original>
